<compile_context>
chip_gen: v7x
topology: tpu7x:2x2x1
jax: 0.10.0
libtpu: 0.0.40
codegen_flags: <defaults>
</compile_context>

<pallas_src>
import jax
import jax.numpy as jnp
from jax.experimental import pallas as pl
from jax.experimental.pallas import tpu as pltpu

_LANE = 128


def actor_kernel(x_ref, w1_ref, b1_ref, w2_ref, b2_ref, out_ref):
    # Shapes (batch on the lane axis):
    #   x_ref  : (S, TM)   states, lane-dense over the batch
    #   w1_ref : (H, S)    fc1 weight (PyTorch layout), resident
    #   b1_ref : (H, 1)
    #   w2_ref : (A, H)    fc2 weight, resident
    #   b2_ref : (A, 1)
    #   out_ref: (A, TM)   action probabilities
    h = jnp.dot(w1_ref[...], x_ref[...], preferred_element_type=jnp.float32) + b1_ref[...]
    h = jnp.maximum(h, 0.0)
    logits = jnp.dot(w2_ref[...], h, preferred_element_type=jnp.float32) + b2_ref[...]

    n_actions = out_ref.shape[0]
    if n_actions == 2:
        # Two-class softmax == sigmoid of the logit difference (mathematically
        # exact); pure VPU/EUP work, no reductions, rows sum to 1 by construction.
        p0 = jax.nn.sigmoid(logits[0:1, :] - logits[1:2, :])
        out_ref[0:1, :] = p0
        out_ref[1:2, :] = 1.0 - p0
    else:
        # General numerically-stable softmax over the (small, sublane) action axis.
        m = jnp.max(logits, axis=0, keepdims=True)
        e = jnp.exp(logits - m)
        out_ref[...] = e / jnp.sum(e, axis=0, keepdims=True)  # exact divide


def _round_up(n, m):
    return ((n + m - 1) // m) * m


def actor_forward(x, w1, b1, w2, b2, *, tm_max=8192):
    """ActorNetwork forward pass.

    x : (B, S) float32 states.
    w1: (H, S), b1: (H, 1), w2: (A, H), b2: (A, 1)  -- PyTorch nn.Linear layout.
    Returns (B, A) action probabilities.
    """
    B, S = x.shape
    H = w1.shape[0]
    A = w2.shape[0]

    # Batch sits on the lane axis -> pad only to the 128-lane granularity.
    b_pad = _round_up(B, _LANE)
    if b_pad <= tm_max:
        tm, n_steps = b_pad, 1                       # single grid step
    else:
        n_steps = pl.cdiv(b_pad, tm_max)
        tm = _round_up(pl.cdiv(b_pad, n_steps), _LANE)
        b_pad = n_steps * tm                         # waste bounded by n_steps*128 rows

    xt = x.T                                         # (S, B): layout plumbing only
    if b_pad != B:
        xt = jnp.pad(xt, ((0, 0), (0, b_pad - B)))

    out = pl.pallas_call(
        actor_kernel,
        out_shape=jax.ShapeDtypeStruct((A, b_pad), jnp.float32),
        grid=(n_steps,),
        in_specs=[
            pl.BlockSpec((S, tm), lambda i: (0, i)),   # batch-tiled states (lane-dense)
            pl.BlockSpec((H, S), lambda i: (0, 0)),    # resident weights / biases
            pl.BlockSpec((H, 1), lambda i: (0, 0)),
            pl.BlockSpec((A, H), lambda i: (0, 0)),
            pl.BlockSpec((A, 1), lambda i: (0, 0)),
        ],
        out_specs=pl.BlockSpec((A, tm), lambda i: (0, i)),
        compiler_params=pltpu.CompilerParams(
            dimension_semantics=("parallel",)          # v7x: shards batch grid when >1 step
        ),
    )(xt, w1, b1, w2, b2)
    return out[:, :B].T


def init_params(key, state_size, action_size, hidden=128):
    """PyTorch nn.Linear default init: U(-1/sqrt(fan_in), 1/sqrt(fan_in)),
    weights stored in native (out_features, in_features) layout."""
    k1, k2, k3, k4 = jax.random.split(key, 4)
    bound1 = 1.0 / jnp.sqrt(jnp.float32(state_size))
    bound2 = 1.0 / jnp.sqrt(jnp.float32(hidden))
    w1 = jax.random.uniform(k1, (hidden, state_size), jnp.float32, -bound1, bound1)
    b1 = jax.random.uniform(k2, (hidden, 1), jnp.float32, -bound1, bound1)
    w2 = jax.random.uniform(k3, (action_size, hidden), jnp.float32, -bound2, bound2)
    b2 = jax.random.uniform(k4, (action_size, 1), jnp.float32, -bound2, bound2)
    return w1, b1, w2, b2


def _reference(x, w1, b1, w2, b2):
    h = jnp.maximum(x @ w1.T + b1.T, 0.0)
    return jax.nn.softmax(h @ w2.T + b2.T, axis=-1)


def _check(probs, ref, n_actions):
    assert probs.shape == ref.shape
    assert probs.shape[1] == n_actions
    assert jnp.allclose(probs, ref, atol=1e-4), "mismatch vs reference"
    assert jnp.allclose(jnp.sum(probs, axis=-1), 1.0, atol=1e-5), "rows do not sum to 1"


if __name__ == "__main__":
    key = jax.random.PRNGKey(0)
    kx1, kx2, kx3, kx4, kp1, kp2 = jax.random.split(key, 6)

    # CartPole: state_size=4, action_size=2 (sigmoid fast path).
    state_size, action_size = 4, 2
    w1, b1, w2, b2 = init_params(kp1, state_size, action_size)

    # Case 1: moderate batch, single grid step (b_pad = 256, tm = 256).
    x_big = jax.random.normal(kx1, (256, state_size), jnp.float32)
    probs_big = jax.block_until_ready(actor_forward(x_big, w1, b1, w2, b2))
    _check(probs_big, _reference(x_big, w1, b1, w2, b2), action_size)

    # Case 2: tiny, non-multiple-of-128 batch (exercises lane padding).
    x_small = jax.random.normal(kx2, (3, state_size), jnp.float32)
    probs_small = jax.block_until_ready(actor_forward(x_small, w1, b1, w2, b2))
    _check(probs_small, _reference(x_small, w1, b1, w2, b2), action_size)

    # Case 3: force a multi-step batch grid (tm_max=128 -> grid=(3,)).
    x_multi = jax.random.normal(kx3, (300, state_size), jnp.float32)
    probs_multi = jax.block_until_ready(actor_forward(x_multi, w1, b1, w2, b2, tm_max=128))
    _check(probs_multi, _reference(x_multi, w1, b1, w2, b2), action_size)

    # Case 4: non-CartPole action count (general softmax path).
    state_size2, action_size2 = 6, 5
    w1b, b1b, w2b, b2b = init_params(kp2, state_size2, action_size2)
    x_gen = jax.random.normal(kx4, (64, state_size2), jnp.float32)
    probs_gen = jax.block_until_ready(actor_forward(x_gen, w1b, b1b, w2b, b2b))
    _check(probs_gen, _reference(x_gen, w1b, b1b, w2b, b2b), action_size2)

    print("KERNEL_OK")
</pallas_src>

<mosaic_0001>
module attributes {stable_mosaic.version = 11 : i64} {
  func.func @actor_kernel(%arg0: i32, %arg1: memref<4x256xf32, #tpu.memory_space<vmem>>, %arg2: memref<128x4xf32, #tpu.memory_space<vmem>>, %arg3: memref<128x1xf32, #tpu.memory_space<vmem>>, %arg4: memref<2x128xf32, #tpu.memory_space<vmem>>, %arg5: memref<2x1xf32, #tpu.memory_space<vmem>>, %arg6: memref<2x256xf32, #tpu.memory_space<vmem>>) attributes {dimension_semantics = [#tpu.dimension_semantics<parallel>], iteration_bounds = array<i64: 1>, scalar_prefetch = 0 : i64, scratch_operands = 0 : i64, tpu.core_type = #tpu.core_type<tc>, window_params = [{transform_indices = @transform_0, window_bounds = array<i64: 4, 256>}, {pipeline_mode = #tpu.pipeline_mode<synchronous>, transform_indices = @transform_1, window_bounds = array<i64: 128, 4>}, {pipeline_mode = #tpu.pipeline_mode<synchronous>, transform_indices = @transform_2, window_bounds = array<i64: 128, 1>}, {pipeline_mode = #tpu.pipeline_mode<synchronous>, transform_indices = @transform_3, window_bounds = array<i64: 2, 128>}, {pipeline_mode = #tpu.pipeline_mode<synchronous>, transform_indices = @transform_4, window_bounds = array<i64: 2, 1>}, {transform_indices = @transform_5, window_bounds = array<i64: 2, 256>}]} {
    %c0 = arith.constant 0 : index
    %c0_0 = arith.constant 0 : index
    %0 = vector.load %arg2[%c0, %c0_0] : memref<128x4xf32, #tpu.memory_space<vmem>>, vector<128x4xf32>
    %c0_1 = arith.constant 0 : index
    %c0_2 = arith.constant 0 : index
    %1 = vector.load %arg1[%c0_1, %c0_2] : memref<4x256xf32, #tpu.memory_space<vmem>>, vector<4x256xf32>
    %cst = arith.constant dense<0.000000e+00> : vector<128x256xf32>
    %2 = tpu.matmul %0, %1, %cst {dimension_numbers = #tpu.dot_dimension_numbers<[1], [0], [0], [1], [0, 0, 1, 1], [], []>} : vector<128x4xf32>, vector<4x256xf32>, vector<128x256xf32> -> vector<128x256xf32>
    %c0_3 = arith.constant 0 : index
    %c0_4 = arith.constant 0 : index
    %3 = vector.load %arg3[%c0_3, %c0_4] : memref<128x1xf32, #tpu.memory_space<vmem>>, vector<128x1xf32>
    %4 = vector.broadcast %3 : vector<128x1xf32> to vector<128x256xf32>
    %5 = arith.addf %2, %4 : vector<128x256xf32>
    %cst_5 = arith.constant 0.000000e+00 : f32
    %6 = vector.broadcast %cst_5 : f32 to vector<128x256xf32>
    %7 = arith.maximumf %5, %6 : vector<128x256xf32>
    %c0_6 = arith.constant 0 : index
    %c0_7 = arith.constant 0 : index
    %8 = vector.load %arg4[%c0_6, %c0_7] : memref<2x128xf32, #tpu.memory_space<vmem>>, vector<2x128xf32>
    %cst_8 = arith.constant dense<0.000000e+00> : vector<2x256xf32>
    %9 = tpu.matmul %8, %7, %cst_8 {dimension_numbers = #tpu.dot_dimension_numbers<[1], [0], [0], [1], [0, 0, 1, 1], [], []>} : vector<2x128xf32>, vector<128x256xf32>, vector<2x256xf32> -> vector<2x256xf32>
    %c0_9 = arith.constant 0 : index
    %c0_10 = arith.constant 0 : index
    %10 = vector.load %arg5[%c0_9, %c0_10] : memref<2x1xf32, #tpu.memory_space<vmem>>, vector<2x1xf32>
    %11 = vector.broadcast %10 : vector<2x1xf32> to vector<2x256xf32>
    %12 = arith.addf %9, %11 : vector<2x256xf32>
    %13 = vector.extract_strided_slice %12 {offsets = [0, 0], sizes = [1, 256], strides = [1, 1]} : vector<2x256xf32> to vector<1x256xf32>
    %14 = vector.extract_strided_slice %12 {offsets = [1, 0], sizes = [1, 256], strides = [1, 1]} : vector<2x256xf32> to vector<1x256xf32>
    %15 = arith.subf %13, %14 : vector<1x256xf32>
    %16 = arith.negf %15 : vector<1x256xf32>
    %17 = math.exp %16 : vector<1x256xf32>
    %cst_11 = arith.constant 1.000000e+00 : f32
    %18 = vector.broadcast %cst_11 : f32 to vector<1x256xf32>
    %19 = arith.addf %18, %17 : vector<1x256xf32>
    %20 = arith.divf %18, %19 : vector<1x256xf32>
    %c0_12 = arith.constant 0 : index
    %c0_13 = arith.constant 0 : index
    %21 = vector.load %arg6[%c0_12, %c0_13] : memref<2x256xf32, #tpu.memory_space<vmem>>, vector<1x256xf32>
    tpu.vector_store %arg6[%c0_12, %c0_13], %20 {strides = array<i32>} : memref<2x256xf32, #tpu.memory_space<vmem>>, vector<1x256xf32>,
    %cst_14 = arith.constant 1.000000e+00 : f32
    %22 = vector.broadcast %cst_14 : f32 to vector<1x256xf32>
    %23 = arith.subf %22, %20 : vector<1x256xf32>
    %c1 = arith.constant 1 : index
    %c0_15 = arith.constant 0 : index
    %24 = vector.load %arg6[%c1, %c0_15] : memref<2x256xf32, #tpu.memory_space<vmem>>, vector<1x256xf32>
    tpu.vector_store %arg6[%c1, %c0_15], %23 {strides = array<i32>} : memref<2x256xf32, #tpu.memory_space<vmem>>, vector<1x256xf32>,
    return
  }
  func.func @transform_0(%arg0: i32) -> (i32, i32) {
    %c0_i32 = arith.constant 0 : i32
    %c0_i32_0 = arith.constant 0 : i32
    return %c0_i32, %arg0 : i32, i32
  }
  func.func @transform_1(%arg0: i32) -> (i32, i32) {
    %c0_i32 = arith.constant 0 : i32
    %c0_i32_0 = arith.constant 0 : i32
    %c0_i32_1 = arith.constant 0 : i32
    return %c0_i32, %c0_i32_0 : i32, i32
  }
  func.func @transform_2(%arg0: i32) -> (i32, i32) {
    %c0_i32 = arith.constant 0 : i32
    %c0_i32_0 = arith.constant 0 : i32
    %c0_i32_1 = arith.constant 0 : i32
    return %c0_i32, %c0_i32_0 : i32, i32
  }
  func.func @transform_3(%arg0: i32) -> (i32, i32) {
    %c0_i32 = arith.constant 0 : i32
    %c0_i32_0 = arith.constant 0 : i32
    %c0_i32_1 = arith.constant 0 : i32
    return %c0_i32, %c0_i32_0 : i32, i32
  }
  func.func @transform_4(%arg0: i32) -> (i32, i32) {
    %c0_i32 = arith.constant 0 : i32
    %c0_i32_0 = arith.constant 0 : i32
    %c0_i32_1 = arith.constant 0 : i32
    return %c0_i32, %c0_i32_0 : i32, i32
  }
  func.func @transform_5(%arg0: i32) -> (i32, i32) {
    %c0_i32 = arith.constant 0 : i32
    %c0_i32_0 = arith.constant 0 : i32
    return %c0_i32, %arg0 : i32, i32
  }
}

</mosaic_0001>

<llo_original>
// kernel: tpu_custom_call.1
$region0: #{tpu_custom_call.1}
  #allocation0 [shape = 'u32[]', space=smem, size = 0x4, offset = 0x4, fixed_abs, tag = 'smem constant byte address 0x4 - core index']
  #allocation1 [shape = 'u32[144,128]{1,0:T(1,128)}', space=vmem, size = 0x12000, scoped, tag = 'internal scratch']
  %s0 = inlined_call_operand.vmem [shape: f32[4,256], index: 0, kind: input, shape index: {}]
  %s1 = inlined_call_operand.vmem [shape: f32[128,4], index: 1, kind: input, shape index: {}]
  %s2 = inlined_call_operand.vmem [shape: f32[128,1], index: 2, kind: input, shape index: {}]
  %s3 = inlined_call_operand.vmem [shape: f32[2,128], index: 3, kind: input, shape index: {}]
  %s4 = inlined_call_operand.vmem [shape: f32[2,1], index: 4, kind: input, shape index: {}]
  %s5 = inlined_call_operand.hbm [shape: f32[2,256], index: 5, kind: output, shape index: {}]
  %s6 = sld [smem:[#allocation0]]
  $region30: #{tpu_custom_call.1} parent=0
    _
  %s8 = ssub.s32 1, %s6
  %s9 = scalar_select 0, %s8, %s6
  $region1: #{tpu_custom_call.1} parent=0
    #allocation2 [shape = 'u8[2048]{0}', space=vmem, size = 0x800, scoped, tag = 'output window, operand 0, single buffered']
    #allocation3 [shape = 's32[1]{0}', space=sflag, size = 0x4, scoped, tag = 'scoped memory for tpu_custom_call.1']
    %10 = vsyncpa [#allocation3], 0
    // Predicated region
    $region2: #{tpu_custom_call.1} parent=1 // pred_check
      _
    $region3: #{tpu_custom_call.1} parent=1 // pred_check_branch
      %12 = sbr.rel (0) target = $region5
    $region4: #{tpu_custom_call.1} parent=1 // pred_region
      _
    $region5: #{tpu_custom_call.1} parent=1 // pred_fallthru
      _
    // Predicated region
    $region6: #{tpu_custom_call.1} parent=1 // pred_check
      _
    $region7: #{tpu_custom_call.1} parent=1 // pred_check_branch
      %14 = sbr.rel (0) target = $region9
    $region8: #{tpu_custom_call.1} parent=1 // pred_region
      _
    $region9: #{tpu_custom_call.1} parent=1 // pred_fallthru
      _
    // Predicated region
    $region10: #{tpu_custom_call.1} parent=1 // pred_check
      _
    $region11: #{tpu_custom_call.1} parent=1 // pred_check_branch
      %16 = sbr.rel (0) target = $region13
    $region12: #{tpu_custom_call.1} parent=1 // pred_region
      _
    $region13: #{tpu_custom_call.1} parent=1 // pred_fallthru
      _
    // Predicated region
    $region14: #{tpu_custom_call.1} parent=1 // pred_check
      _
    $region15: #{tpu_custom_call.1} parent=1 // pred_check_branch
      %18 = sbr.rel (0) target = $region17
    $region16: #{tpu_custom_call.1} parent=1 // pred_region
      _
    $region17: #{tpu_custom_call.1} parent=1 // pred_fallthru
      _
    // Predicated region
    $region18: #{tpu_custom_call.1} parent=1 // pred_check
      _
    $region19: #{tpu_custom_call.1} parent=1 // pred_check_branch
      %20 = sbr.rel (0) target = $region21
    $region20: #{tpu_custom_call.1} parent=1 // pred_region
      _
    $region21: #{tpu_custom_call.1} parent=1 // pred_fallthru
      _
    %v21 = vld [vmem:[%s1] sm:$0xff]
    %v22 = vld [vmem:[%s1 + $0x8] sm:$0xff]
    %v23 = vld [vmem:[%s1 + $0x10] sm:$0xff]
    %v24 = vld [vmem:[%s1 + $0x18] sm:$0xff]
    %v25 = vld [vmem:[%s1 + $0x20] sm:$0xff]
    %v26 = vld [vmem:[%s1 + $0x28] sm:$0xff]
    %v27 = vld [vmem:[%s1 + $0x30] sm:$0xff]
    %v28 = vld [vmem:[%s1 + $0x38] sm:$0xff]
    %v29 = vld [vmem:[%s1 + $0x40] sm:$0xff]
    %v30 = vld [vmem:[%s1 + $0x48] sm:$0xff]
    %v31 = vld [vmem:[%s1 + $0x50] sm:$0xff]
    %v32 = vld [vmem:[%s1 + $0x58] sm:$0xff]
    %v33 = vld [vmem:[%s1 + $0x60] sm:$0xff]
    %v34 = vld [vmem:[%s1 + $0x68] sm:$0xff]
    %v35 = vld [vmem:[%s1 + $0x70] sm:$0xff]
    %v36 = vld [vmem:[%s1 + $0x78] sm:$0xff]
    %v37 = vld [vmem:[%s0] sm:$0xff]
    %v38 = vld [vmem:[%s2] sm:$0xff]
    %v39 = vld [vmem:[%s2 + $0x8] sm:$0xff]
    %v40 = vld [vmem:[%s2 + $0x10] sm:$0xff]
    %v41 = vld [vmem:[%s2 + $0x18] sm:$0xff]
    %v42 = vld [vmem:[%s2 + $0x20] sm:$0xff]
    %v43 = vld [vmem:[%s2 + $0x28] sm:$0xff]
    %v44 = vld [vmem:[%s2 + $0x30] sm:$0xff]
    %v45 = vld [vmem:[%s2 + $0x38] sm:$0xff]
    %v46 = vld [vmem:[%s2 + $0x40] sm:$0xff]
    %v47 = vld [vmem:[%s2 + $0x48] sm:$0xff]
    %v48 = vld [vmem:[%s2 + $0x50] sm:$0xff]
    %v49 = vld [vmem:[%s2 + $0x58] sm:$0xff]
    %v50 = vld [vmem:[%s2 + $0x60] sm:$0xff]
    %v51 = vld [vmem:[%s2 + $0x68] sm:$0xff]
    %v52 = vld [vmem:[%s2 + $0x70] sm:$0xff]
    %v53 = vld [vmem:[%s2 + $0x78] sm:$0xff]
    %55 = vset.pattern.permute.xlu0 0
    %56 = vperm.xlu0 %55, %v38
    %v57 = vpop.permute.xlu0 %56
    %60 = vset.pattern.permute.xlu0 0
    %61 = vperm.xlu0 %60, %v39
    %v62 = vpop.permute.xlu0 %61
    %65 = vset.pattern.permute.xlu0 0
    %66 = vperm.xlu0 %65, %v40
    %v67 = vpop.permute.xlu0 %66
    %70 = vset.pattern.permute.xlu0 0
    %71 = vperm.xlu0 %70, %v41
    %v72 = vpop.permute.xlu0 %71
    %75 = vset.pattern.permute.xlu0 0
    %76 = vperm.xlu0 %75, %v42
    %v77 = vpop.permute.xlu0 %76
    %80 = vset.pattern.permute.xlu0 0
    %81 = vperm.xlu0 %80, %v43
    %v82 = vpop.permute.xlu0 %81
    %85 = vset.pattern.permute.xlu0 0
    %86 = vperm.xlu0 %85, %v44
    %v87 = vpop.permute.xlu0 %86
    %90 = vset.pattern.permute.xlu0 0
    %91 = vperm.xlu0 %90, %v45
    %v92 = vpop.permute.xlu0 %91
    %95 = vset.pattern.permute.xlu0 0
    %96 = vperm.xlu0 %95, %v46
    %v97 = vpop.permute.xlu0 %96
    %100 = vset.pattern.permute.xlu0 0
    %101 = vperm.xlu0 %100, %v47
    %v102 = vpop.permute.xlu0 %101
    %105 = vset.pattern.permute.xlu0 0
    %106 = vperm.xlu0 %105, %v48
    %v107 = vpop.permute.xlu0 %106
    %110 = vset.pattern.permute.xlu0 0
    %111 = vperm.xlu0 %110, %v49
    %v112 = vpop.permute.xlu0 %111
    %115 = vset.pattern.permute.xlu0 0
    %116 = vperm.xlu0 %115, %v50
    %v117 = vpop.permute.xlu0 %116
    %120 = vset.pattern.permute.xlu0 0
    %121 = vperm.xlu0 %120, %v51
    %v122 = vpop.permute.xlu0 %121
    %125 = vset.pattern.permute.xlu0 0
    %126 = vperm.xlu0 %125, %v52
    %v127 = vpop.permute.xlu0 %126
    %130 = vset.pattern.permute.xlu0 0
    %131 = vperm.xlu0 %130, %v53
    %v132 = vpop.permute.xlu0 %131
    %v135 = vcombine.high %v37, %v37
    %vm136 = vcmask 31744
    %v138 = vsel %vm136, %v21, 0
    %v141 = vsel %vm136, %v22, 0
    %v144 = vsel %vm136, %v23, 0
    %v147 = vsel %vm136, %v24, 0
    %v150 = vsel %vm136, %v25, 0
    %v153 = vsel %vm136, %v26, 0
    %v156 = vsel %vm136, %v27, 0
    %v159 = vsel %vm136, %v28, 0
    %v162 = vsel %vm136, %v29, 0
    %v165 = vsel %vm136, %v30, 0
    %v168 = vsel %vm136, %v31, 0
    %v171 = vsel %vm136, %v32, 0
    %v174 = vsel %vm136, %v33, 0
    %v177 = vsel %vm136, %v34, 0
    %v180 = vsel %vm136, %v35, 0
    %v183 = vsel %vm136, %v36, 0
    %vm185 = vcmask 1043456
    %v186 = vsel %vm185, %v37, 0
    %v188 = vsel %vm185, %v135, 0
    %190 = vmatprep.subr.mxu0 %v188
    %191 = vmatpush1.msra.mxu0 %v186
    %192 = vmatprep.subr.mxu0 0.0
    %193 = vmatpush1.msra.mxu0 0.0
    %194 = vmatprep.subr.mxu0 0.0
    %195 = vmatpush1.msra.mxu0 0.0
    %196 = vmatprep.subr.mxu0 0.0
    %197 = vmatpush1.msra.mxu0 0.0
    %198 = vmatprep.subr.mxu0 0.0
    %199 = vmatpush1.msra.mxu0 0.0
    %200 = vmatprep.subr.mxu0 0.0
    %201 = vmatpush1.msra.mxu0 0.0
    %202 = vmatprep.subr.mxu0 0.0
    %203 = vmatpush1.msra.mxu0 0.0
    %204 = vmatprep.subr.mxu0 0.0
    %205 = vmatpush1.msra.mxu0 0.0
    %206 = vmatprep.subr.mxu0 0.0
    %207 = vmatpush1.msra.mxu0 0.0
    %208 = vmatprep.subr.mxu0 0.0
    %209 = vmatpush1.msra.mxu0 0.0
    %210 = vmatprep.subr.mxu0 0.0
    %211 = vmatpush1.msra.mxu0 0.0
    %212 = vmatprep.subr.mxu0 0.0
    %213 = vmatpush1.msra.mxu0 0.0
    %214 = vmatprep.subr.mxu0 0.0
    %215 = vmatpush1.msra.mxu0 0.0
    %216 = vmatprep.subr.mxu0 0.0
    %217 = vmatpush1.msra.mxu0 0.0
    %218 = vmatprep.subr.mxu0 0.0
    %219 = vmatpush1.msra.mxu0 0.0
    %220 = vmatprep.subr.mxu0 0.0
    %221 = vmatpush1.msra.mxu0 0.0
    %222 = vmatprep.subr.mxu0 0.0
    %223 = vmatpush1.msra.mxu0 0.0
    %224 = vmatprep.subr.mxu0 0.0
    %225 = vmatpush1.msra.mxu0 0.0
    %226 = vmatprep.subr.mxu0 0.0
    %227 = vmatpush1.msra.mxu0 0.0
    %228 = vmatprep.subr.mxu0 0.0
    %229 = vmatpush1.msra.mxu0 0.0
    %230 = vmatprep.subr.mxu0 0.0
    %231 = vmatpush1.msra.mxu0 0.0
    %232 = vmatprep.subr.mxu0 0.0
    %233 = vmatpush1.msra.mxu0 0.0
    %234 = vmatprep.subr.mxu0 0.0
    %235 = vmatpush1.msra.mxu0 0.0
    %236 = vmatprep.subr.mxu0 0.0
    %237 = vmatpush1.msra.mxu0 0.0
    %238 = vmatprep.subr.mxu0 0.0
    %239 = vmatpush1.msra.mxu0 0.0
    %240 = vmatprep.subr.mxu0 0.0
    %241 = vmatpush1.msra.mxu0 0.0
    %242 = vmatprep.subr.mxu0 0.0
    %243 = vmatpush1.msra.mxu0 0.0
    %244 = vmatprep.subr.mxu0 0.0
    %245 = vmatpush1.msra.mxu0 0.0
    %246 = vmatprep.subr.mxu0 0.0
    %247 = vmatpush1.msra.mxu0 0.0
    %248 = vmatprep.subr.mxu0 0.0
    %249 = vmatpush1.msra.mxu0 0.0
    %250 = vmatprep.subr.mxu0 0.0
    %251 = vmatpush1.msra.mxu0 0.0
    %252 = vmatprep.subr.mxu0 0.0
    %253 = vmatpush1.msra.mxu0 0.0
    %254 = vmatprep.mubr.f32.mxu0 0.0
    %255 = vmatmul.mubr.f32.gmra.mrb[0].mxu0 %v138
    %v256 = vpop.f32.mrb[0].mxu0
    %v257 = vadd.f32 %v57, %v256
    %v258 = vpop.f32.mrb[0].mxu0
    %v259 = vadd.f32 %v57, %v258
    %260 = vmatprep.mubr.f32.mxu0 0.0
    %261 = vmatmul.mubr.f32.gmra.mrb[0].mxu0 %v141
    %v262 = vpop.f32.mrb[0].mxu0
    %v263 = vadd.f32 %v62, %v262
    %v264 = vpop.f32.mrb[0].mxu0
    %v265 = vadd.f32 %v62, %v264
    %266 = vmatprep.mubr.f32.mxu0 0.0
    %267 = vmatmul.mubr.f32.gmra.mrb[0].mxu0 %v144
    %v268 = vpop.f32.mrb[0].mxu0
    %v269 = vadd.f32 %v67, %v268
    %v270 = vpop.f32.mrb[0].mxu0
    %v271 = vadd.f32 %v67, %v270
    %272 = vmatprep.mubr.f32.mxu0 0.0
    %273 = vmatmul.mubr.f32.gmra.mrb[0].mxu0 %v147
    %v274 = vpop.f32.mrb[0].mxu0
    %v275 = vadd.f32 %v72, %v274
    %v276 = vpop.f32.mrb[0].mxu0
    %v277 = vadd.f32 %v72, %v276
    %278 = vmatprep.mubr.f32.mxu0 0.0
    %279 = vmatmul.mubr.f32.gmra.mrb[0].mxu0 %v150
    %v280 = vpop.f32.mrb[0].mxu0
    %v281 = vadd.f32 %v77, %v280
    %v282 = vpop.f32.mrb[0].mxu0
    %v283 = vadd.f32 %v77, %v282
    %284 = vmatprep.mubr.f32.mxu0 0.0
    %285 = vmatmul.mubr.f32.gmra.mrb[0].mxu0 %v153
    %v286 = vpop.f32.mrb[0].mxu0
    %v287 = vadd.f32 %v82, %v286
    %v288 = vpop.f32.mrb[0].mxu0
    %v289 = vadd.f32 %v82, %v288
    %290 = vmatprep.mubr.f32.mxu0 0.0
    %291 = vmatmul.mubr.f32.gmra.mrb[0].mxu0 %v156
    %v292 = vpop.f32.mrb[0].mxu0
    %v293 = vadd.f32 %v87, %v292
    %v294 = vpop.f32.mrb[0].mxu0
    %v295 = vadd.f32 %v87, %v294
    %296 = vmatprep.mubr.f32.mxu0 0.0
    %297 = vmatmul.mubr.f32.gmra.mrb[0].mxu0 %v159
    %v298 = vpop.f32.mrb[0].mxu0
    %v299 = vadd.f32 %v92, %v298
    %v300 = vpop.f32.mrb[0].mxu0
    %v301 = vadd.f32 %v92, %v300
    %302 = vmatprep.mubr.f32.mxu0 0.0
    %303 = vmatmul.mubr.f32.gmra.mrb[0].mxu0 %v162
    %v304 = vpop.f32.mrb[0].mxu0
    %v305 = vadd.f32 %v97, %v304
    %v306 = vpop.f32.mrb[0].mxu0
    %v307 = vadd.f32 %v97, %v306
    %308 = vmatprep.mubr.f32.mxu0 0.0
    %309 = vmatmul.mubr.f32.gmra.mrb[0].mxu0 %v165
    %v310 = vpop.f32.mrb[0].mxu0
    %v311 = vadd.f32 %v102, %v310
    %v312 = vpop.f32.mrb[0].mxu0
    %v313 = vadd.f32 %v102, %v312
    %314 = vmatprep.mubr.f32.mxu0 0.0
    %315 = vmatmul.mubr.f32.gmra.mrb[0].mxu0 %v168
    %v316 = vpop.f32.mrb[0].mxu0
    %v317 = vadd.f32 %v107, %v316
    %v318 = vpop.f32.mrb[0].mxu0
    %v319 = vadd.f32 %v107, %v318
    %320 = vmatprep.mubr.f32.mxu0 0.0
    %321 = vmatmul.mubr.f32.gmra.mrb[0].mxu0 %v171
    %v322 = vpop.f32.mrb[0].mxu0
    %v323 = vadd.f32 %v112, %v322
    %v324 = vpop.f32.mrb[0].mxu0
    %v325 = vadd.f32 %v112, %v324
    %326 = vmatprep.mubr.f32.mxu0 0.0
    %327 = vmatmul.mubr.f32.gmra.mrb[0].mxu0 %v174
    %v328 = vpop.f32.mrb[0].mxu0
    %v329 = vadd.f32 %v117, %v328
    %v330 = vpop.f32.mrb[0].mxu0
    %v331 = vadd.f32 %v117, %v330
    %332 = vmatprep.mubr.f32.mxu0 0.0
    %333 = vmatmul.mubr.f32.gmra.mrb[0].mxu0 %v177
    %v334 = vpop.f32.mrb[0].mxu0
    %v335 = vadd.f32 %v122, %v334
    %v336 = vpop.f32.mrb[0].mxu0
    %v337 = vadd.f32 %v122, %v336
    %338 = vmatprep.mubr.f32.mxu0 0.0
    %339 = vmatmul.mubr.f32.gmra.mrb[0].mxu0 %v180
    %v340 = vpop.f32.mrb[0].mxu0
    %v341 = vadd.f32 %v127, %v340
    %v342 = vpop.f32.mrb[0].mxu0
    %v343 = vadd.f32 %v127, %v342
    %344 = vmatprep.mubr.f32.mxu0 0.0
    %345 = vmatmul.mubr.f32.gmra.mrb[0].mxu0 %v183
    %v346 = vpop.f32.mrb[0].mxu0
    %v347 = vadd.f32 %v132, %v346
    %v348 = vpop.f32.mrb[0].mxu0
    %v349 = vadd.f32 %v132, %v348
    %350 = vdwg.mxu0
    %v351 = vmax.f32 %v257, 0.0
    %v352 = vmax.f32 %v259, 0.0
    %v353 = vmax.f32 %v263, 0.0
    %v354 = vmax.f32 %v265, 0.0
    %v355 = vmax.f32 %v269, 0.0
    %v356 = vmax.f32 %v271, 0.0
    %v357 = vmax.f32 %v275, 0.0
    %v358 = vmax.f32 %v277, 0.0
    %v359 = vmax.f32 %v281, 0.0
    %v360 = vmax.f32 %v283, 0.0
    %v361 = vmax.f32 %v287, 0.0
    %v362 = vmax.f32 %v289, 0.0
    %v363 = vmax.f32 %v293, 0.0
    %v364 = vmax.f32 %v295, 0.0
    %v365 = vmax.f32 %v299, 0.0
    %v366 = vmax.f32 %v301, 0.0
    %v367 = vmax.f32 %v305, 0.0
    %v368 = vmax.f32 %v307, 0.0
    %v369 = vmax.f32 %v311, 0.0
    %v370 = vmax.f32 %v313, 0.0
    %v371 = vmax.f32 %v317, 0.0
    %v372 = vmax.f32 %v319, 0.0
    %v373 = vmax.f32 %v323, 0.0
    %v374 = vmax.f32 %v325, 0.0
    %v375 = vmax.f32 %v329, 0.0
    %v376 = vmax.f32 %v331, 0.0
    %v377 = vmax.f32 %v335, 0.0
    %v378 = vmax.f32 %v337, 0.0
    %v379 = vmax.f32 %v341, 0.0
    %v380 = vmax.f32 %v343, 0.0
    %v381 = vmax.f32 %v347, 0.0
    %v382 = vmax.f32 %v349, 0.0
    %v383 = vld [vmem:[%s3] sm:$0x3]
    %v384 = vld [vmem:[%s4] sm:$0x3]
    %386 = vset.pattern.permute.xlu0 0
    %387 = vperm.xlu0 %386, %v384
    %v388 = vpop.permute.xlu0 %387
    %390 = vmatprep.subr.mxu0 %v352
    %391 = vmatpush1.msra.mxu0 %v351
    %392 = vmatprep.subr.mxu0 %v354
    %393 = vmatpush1.msra.mxu0 %v353
    %394 = vmatprep.subr.mxu0 %v356
    %395 = vmatpush1.msra.mxu0 %v355
    %396 = vmatprep.subr.mxu0 %v358
    %397 = vmatpush1.msra.mxu0 %v357
    %398 = vmatprep.subr.mxu0 %v360
    %399 = vmatpush1.msra.mxu0 %v359
    %400 = vmatprep.subr.mxu0 %v362
    %401 = vmatpush1.msra.mxu0 %v361
    %402 = vmatprep.subr.mxu0 %v364
    %403 = vmatpush1.msra.mxu0 %v363
    %404 = vmatprep.subr.mxu0 %v366
    %405 = vmatpush1.msra.mxu0 %v365
    %406 = vmatprep.subr.mxu0 %v368
    %407 = vmatpush1.msra.mxu0 %v367
    %408 = vmatprep.subr.mxu0 %v370
    %409 = vmatpush1.msra.mxu0 %v369
    %410 = vmatprep.subr.mxu0 %v372
    %411 = vmatpush1.msra.mxu0 %v371
    %412 = vmatprep.subr.mxu0 %v374
    %413 = vmatpush1.msra.mxu0 %v373
    %414 = vmatprep.subr.mxu0 %v376
    %415 = vmatpush1.msra.mxu0 %v375
    %416 = vmatprep.subr.mxu0 %v378
    %417 = vmatpush1.msra.mxu0 %v377
    %418 = vmatprep.subr.mxu0 %v380
    %419 = vmatpush1.msra.mxu0 %v379
    %420 = vmatprep.subr.mxu0 %v382
    %421 = vmatpush1.msra.mxu0 %v381
    %422 = vmatprep.subr.mxu0 0.0
    %423 = vmatpush1.msra.mxu0 0.0
    %424 = vmatprep.subr.mxu0 0.0
    %425 = vmatpush1.msra.mxu0 0.0
    %426 = vmatprep.subr.mxu0 0.0
    %427 = vmatpush1.msra.mxu0 0.0
    %428 = vmatprep.subr.mxu0 0.0
    %429 = vmatpush1.msra.mxu0 0.0
    %430 = vmatprep.subr.mxu0 0.0
    %431 = vmatpush1.msra.mxu0 0.0
    %432 = vmatprep.subr.mxu0 0.0
    %433 = vmatpush1.msra.mxu0 0.0
    %434 = vmatprep.subr.mxu0 0.0
    %435 = vmatpush1.msra.mxu0 0.0
    %436 = vmatprep.subr.mxu0 0.0
    %437 = vmatpush1.msra.mxu0 0.0
    %438 = vmatprep.subr.mxu0 0.0
    %439 = vmatpush1.msra.mxu0 0.0
    %440 = vmatprep.subr.mxu0 0.0
    %441 = vmatpush1.msra.mxu0 0.0
    %442 = vmatprep.subr.mxu0 0.0
    %443 = vmatpush1.msra.mxu0 0.0
    %444 = vmatprep.subr.mxu0 0.0
    %445 = vmatpush1.msra.mxu0 0.0
    %446 = vmatprep.subr.mxu0 0.0
    %447 = vmatpush1.msra.mxu0 0.0
    %448 = vmatprep.subr.mxu0 0.0
    %449 = vmatpush1.msra.mxu0 0.0
    %450 = vmatprep.subr.mxu0 0.0
    %451 = vmatpush1.msra.mxu0 0.0
    %452 = vmatprep.subr.mxu0 0.0
    %453 = vmatpush1.msra.mxu0 0.0
    %454 = vmatprep.mubr.f32.mxu0 0.0
    %455 = vmatmul.mubr.f32.gmra.mrb[0].mxu0 %v383
    %v456 = vpop.f32.mrb[0].mxu0
    %v457 = vadd.f32 %v388, %v456
    %v458 = vpop.f32.mrb[0].mxu0
    %v459 = vadd.f32 %v388, %v458
    %460 = vdwg.mxu0
    %v463 = vrot.slane %v457, 1
    %v464 = vrot.slane %v459, 1
    %v467 = vsub.f32 %v457, %v463
    %v468 = vsub.f32 %v459, %v464
    %v469 = vxor.u32 %v467, 2147483648
    %v470 = vxor.u32 %v468, 2147483648
    %v471 = vmul.f32 %v469, 1.442695
    %v472 = vpow.pop %v471
    %v473 = vmul.f32 %v470, 1.442695
    %v474 = vpow.pop %v473
    %v475 = vadd.f32 %v472, 1.0
    %v476 = vadd.f32 %v474, 1.0
    %v477 = vrcp.pop %v475
    %v478 = vmul.f32 1.0, %v477
    %v479 = vrcp.pop %v476
    %v480 = vmul.f32 1.0, %v479
    %v483 = vcombine.low %v478, %v480
    %v485 = vunpack.c.l.s4 1966171168
    %v486 = vunpack.c.0.s8 %v485
    %v487 = vlaneseq
    %v488 = vshrl.u32 %v487, 7
    %v489 = vsub.s32 %v486, %v488
    %v490 = vrot.slane %v483, %v489
    %v492 = vunpack.c.l.s4 1966171168
    %v493 = vunpack.c.0.s8 %v492
    %v494 = vlaneseq
    %v495 = vshrl.u32 %v494, 7
    %v496 = vsub.s32 %v493, %v495
    %v497 = vrot.slane %v490, %v496
    %v499 = vlaneseq
    %vm500 = vcmp.ge.s32.totalorder %v499, 0
    %vm501 = vcmp.lt.s32.totalorder %v499, 256
    %vm502 = vmand %vm500, %vm501
    %503 = vst.msk [vmem:[#allocation2] ss:$2 sm:$0x3] %vm502, %v497
    %v504 = vsub.f32 1.0, %v478
    %v505 = vsub.f32 1.0, %v480
    %v508 = vcombine.low %v504, %v505
    %v510 = vunpack.c.l.s4 1966171168
    %v511 = vunpack.c.0.s8 %v510
    %v512 = vlaneseq
    %v513 = vshrl.u32 %v512, 7
    %v514 = vsub.s32 %v511, %v513
    %v515 = vrot.slane %v508, %v514
    %v517 = vunpack.c.l.s4 1966171168
    %v518 = vunpack.c.0.s8 %v517
    %v519 = vlaneseq
    %v520 = vshrl.u32 %v519, 7
    %v521 = vsub.s32 %v518, %v520
    %v522 = vrot.slane %v515, %v521
    %s524 = scalar_lea.vmem [#allocation2], 1
    %525 = vst.msk [vmem:[%s524] ss:$2 sm:$0x3] %vm502, %v522
    // Predicated region
    $region22: #{tpu_custom_call.1} parent=1 // pred_check
      _
    $region23: #{tpu_custom_call.1} parent=1 // pred_check_branch
      %527 = sbr.rel (0) target = $region25
    $region24: #{tpu_custom_call.1} parent=1 // pred_region
      %s529 = ssub.s32 64, 64
      %530 = vsyncadd [#allocation3], %s529
      %s532 = sshll.u32 [#allocation2], 4
      %s533 = int_to_ptr.vmem [resolvable:$true] %s532
      %535 = dma.vmem_to_hbm [thread:$0]  %s533, 64, %s5, [#allocation3]
    $region25: #{tpu_custom_call.1} parent=1 // pred_fallthru
      _
    // Predicated region
    $region26: #{tpu_custom_call.1} parent=1 // pred_check
      _
    $region27: #{tpu_custom_call.1} parent=1 // pred_check_branch
      %537 = sbr.rel (0) target = $region29
    $region28: #{tpu_custom_call.1} parent=1 // pred_region
      %538 = dma.done [#allocation3], 64
    $region29: #{tpu_custom_call.1} parent=1 // pred_fallthru
      _
    %539 = vsyncpa [#allocation3], 1

</llo_original>
